<compile_context>
chip_gen: v5e
topology: v5e:2x2
jax: 0.10.0
libtpu: 0.0.40
codegen_flags: <defaults>
</compile_context>

<pallas_src>
import functools

import jax
import jax.numpy as jnp
from jax import lax
from jax.experimental import pallas as pl
from jax.experimental.pallas import tpu as pltpu

# ---- small synthetic sizes consistent with the module ----
N_USERS = 16
N_ITEMS = 128
TOP_K = 8          # stands in for k=100 at this small scale
BATCH = 2

_LANE = 128                  # lane-axis (last dim) alignment
_SUBLANE_BF16 = 16           # sublane alignment for bf16 operands


def _cdiv(a, b):
    return -(-a // b)


def _round_up(x, m):
    return _cdiv(x, m) * m


def _vmem_capacity_bytes():
    # Generation-aware budget; conservative (v7x-class 64 MiB) fallback when
    # the query is unavailable (e.g. interpret mode on CPU).
    try:
        return int(pltpu.get_tpu_info().vmem_capacity_bytes)
    except Exception:
        return 64 * 1024 * 1024


_PHYS_VMEM = _vmem_capacity_bytes()
_BIG_VMEM = _PHYS_VMEM >= 100 * 1024 * 1024          # v5e / v6e: 128 MiB physical
_VMEM_LIMIT = max(32 * 1024 * 1024,
                  min((_PHYS_VMEM * 3) // 4, 96 * 1024 * 1024))

# Output-tile caps: 1024-class tiles clear the HBM/MXU crossover on every
# generation while keeping the worst-case working set ~16 MiB (fits v7x's
# 64 MiB VMEM); with 128 MiB physical VMEM (v5e/v6e) push to 2048-class tiles
# (worst-case working set ~48 MiB, under the 96 MiB scoped limit).
_OUT_TILE_CAP = 2048 if _BIG_VMEM else 1024
_K_TILE_CAP = 1024


def _pick_tile(dim, align, cap):
    """Aligned tile <= cap with padding bounded by ~one align unit per block
    (never by a whole cap).  Returns (tile, padded_dim)."""
    dim = max(int(dim), 1)
    n = _cdiv(dim, cap)
    tile = min(_round_up(_cdiv(dim, n), align), _round_up(cap, align))
    return tile, _round_up(dim, tile)


def _pad2(a, rows, cols):
    r, c = a.shape
    if r == rows and c == cols:
        return a
    return jnp.pad(a, ((0, rows - r), (0, cols - c)))


# ---------------------------------------------------------------------------
# Kernel 1: item-item cosine similarity, triangular tile grid
#   S[i, j] = (sum_u R[u,i] R[u,j]) * rsqrt(|i|^2 + eps) * rsqrt(|j|^2 + eps)
# Only upper-triangle (bi <= bj) tile pairs are computed; mirror + zero-diag
# happen in one elementwise JAX pass afterwards.
# ---------------------------------------------------------------------------
def _cosine_sim_kernel(bi_ref, bj_ref, rt_ref, r_ref, invi_ref, invj_ref,
                       s_ref, *, n_ku):
    # Scalar-prefetch tables are consumed only by the index_maps.
    del bi_ref, bj_ref
    # NOTE: program_id only at the top level of the body (never inside a
    # pl.when body) — nested-cond program_id breaks the interpret fallback.
    ku = pl.program_id(1)

    @pl.when(ku == 0)
    def _init():
        s_ref[...] = jnp.zeros_like(s_ref)

    # Canonical (ti, tu) x (tu, tj) contraction on the MXU; f32 accumulation
    # directly into the resident output block (no scratch).
    s_ref[...] += jnp.dot(rt_ref[...], r_ref[...],
                          preferred_element_type=jnp.float32)

    @pl.when(ku == n_ku - 1)
    def _finalize():
        # Cheap VPU epilogue: per-item rsqrt norms were computed once outside
        # (I rsqrts instead of I^2 divides).
        s_ref[...] = s_ref[...] * invi_ref[...] * invj_ref[...]


def cosine_similarity(r, *, item_tile_cap=None, user_tile_cap=_K_TILE_CAP,
                      eps=1e-8):
    """Item-item cosine similarity of R (users x items), zero diagonal."""
    if item_tile_cap is None:
        item_tile_cap = _OUT_TILE_CAP
    u, i = r.shape
    ti, i_pad = _pick_tile(i, _LANE, item_tile_cap)
    # The user axis is the lane axis of R^T, so it must be 128-aligned.
    tu, u_pad = _pick_tile(u, _LANE, user_tile_cap)

    # If the whole item axis fits one tile, split it (when alignment allows) so
    # the triangular grid has >1 pair and v7x's second TensorCore gets work.
    if i_pad // ti == 1 and ti % (2 * _LANE) == 0:
        ti //= 2

    r_pad = _pad2(r, u_pad, i_pad)
    r_bf16 = r_pad.astype(jnp.bfloat16)          # binary 0/1: exact in bf16
    rt_bf16 = r_bf16.T                           # one-time transpose: canonical LHS

    # Per-item inverse norms (f32). eps is added per squared norm (rsqrt form),
    # a slight deviation from dividing by (|i||j| + eps); padded zero-norm
    # columns stay harmless because their gram entries are exactly zero.
    inv = lax.rsqrt(jnp.sum(r_pad * r_pad, axis=0) + eps)   # (i_pad,) f32
    inv_col = inv.reshape(i_pad, 1)
    inv_row = inv.reshape(1, i_pad)

    n_blk = i_pad // ti
    n_ku = u_pad // tu
    bi_tab, bj_tab = jnp.triu_indices(n_blk)     # upper-triangle tile pairs
    bi_tab = bi_tab.astype(jnp.int32)
    bj_tab = bj_tab.astype(jnp.int32)
    n_pairs = n_blk * (n_blk + 1) // 2

    s_up = pl.pallas_call(
        functools.partial(_cosine_sim_kernel, n_ku=n_ku),
        out_shape=jax.ShapeDtypeStruct((i_pad, i_pad), jnp.float32),
        grid_spec=pltpu.PrefetchScalarGridSpec(
            num_scalar_prefetch=2,
            grid=(n_pairs, n_ku),
            in_specs=[
                pl.BlockSpec((ti, tu), lambda p, ku, bi, bj: (bi[p], ku)),  # R^T rows
                pl.BlockSpec((tu, ti), lambda p, ku, bi, bj: (ku, bj[p])),  # R cols
                pl.BlockSpec((ti, 1), lambda p, ku, bi, bj: (bi[p], 0)),    # 1/|i|
                pl.BlockSpec((1, ti), lambda p, ku, bi, bj: (0, bj[p])),    # 1/|j|
            ],
            out_specs=pl.BlockSpec((ti, ti),
                                   lambda p, ku, bi, bj: (bi[p], bj[p]))),
        compiler_params=pltpu.CompilerParams(
            dimension_semantics=("parallel", "arbitrary"),
            vmem_limit_bytes=_VMEM_LIMIT),
    )(bi_tab, bj_tab, rt_bf16, r_bf16, inv_col, inv_row)

    # Mirror the lower triangle (its tiles were never written) and zero the
    # diagonal in a single fused elementwise pass.
    blk = jnp.arange(i_pad, dtype=jnp.int32) // ti
    upper = blk[:, None] <= blk[None, :]
    s_full = jnp.where(upper, s_up, s_up.T)
    idx = jnp.arange(i_pad, dtype=jnp.int32)
    s_full = jnp.where(idx[:, None] == idx[None, :], 0.0, s_full)
    return s_full[:i, :i]


# ---------------------------------------------------------------------------
# Kernel 2: tiled canonical matmul pred_mat = A @ B  (B = W^T, materialized
# once in __init__); bf16 operands, f32 accumulation resident in the output.
# ---------------------------------------------------------------------------
def _matmul_kernel(a_ref, b_ref, o_ref):
    # program_id only at the top level of the body (interpret-fallback safe).
    kk = pl.program_id(2)

    @pl.when(kk == 0)
    def _init():
        o_ref[...] = jnp.zeros_like(o_ref)

    o_ref[...] += jnp.dot(a_ref[...], b_ref[...],
                          preferred_element_type=jnp.float32)


def matmul_f32acc(a, b, *, tm_cap=None, tn_cap=None, tk_cap=_K_TILE_CAP):
    """A @ B with bf16 MXU operands and f32 accumulation."""
    if tm_cap is None:
        tm_cap = _OUT_TILE_CAP
    if tn_cap is None:
        tn_cap = _OUT_TILE_CAP
    m, k = a.shape
    kb, n = b.shape
    assert k == kb
    tm, m_pad = _pick_tile(m, _SUBLANE_BF16, tm_cap)
    tn, n_pad = _pick_tile(n, _LANE, tn_cap)
    tk, k_pad = _pick_tile(k, _LANE, tk_cap)

    # Keep at least one parallel grid axis with extent >= 2 when alignment
    # allows it, so both v7x TensorCores get work.
    if m_pad // tm == 1 and n_pad // tn == 1:
        if tn % (2 * _LANE) == 0:
            tn //= 2
        elif tm % (2 * _SUBLANE_BF16) == 0:
            tm //= 2

    a_p = _pad2(a, m_pad, k_pad).astype(jnp.bfloat16)
    b_p = _pad2(b, k_pad, n_pad).astype(jnp.bfloat16)

    out = pl.pallas_call(
        _matmul_kernel,
        out_shape=jax.ShapeDtypeStruct((m_pad, n_pad), jnp.float32),
        grid_spec=pltpu.PrefetchScalarGridSpec(
            num_scalar_prefetch=0,
            grid=(m_pad // tm, n_pad // tn, k_pad // tk),
            in_specs=[pl.BlockSpec((tm, tk), lambda i, j, kk: (i, kk)),
                      pl.BlockSpec((tk, tn), lambda i, j, kk: (kk, j))],
            out_specs=pl.BlockSpec((tm, tn), lambda i, j, kk: (i, j))),
        compiler_params=pltpu.CompilerParams(
            dimension_semantics=("parallel", "parallel", "arbitrary"),
            vmem_limit_bytes=_VMEM_LIMIT),
    )(a_p, b_p)
    return out[:m, :n]


# ---------------------------------------------------------------------------
# Kernel 3: full_predict — gather pred_mat rows for a batch of user ids
# (scalar-prefetch data-dependent index_map; lane-dense (1, n_items) rows).
# ---------------------------------------------------------------------------
def _gather_rows_kernel(uid_ref, pred_ref, out_ref):
    del uid_ref  # row selection happens in the BlockSpec index_map
    out_ref[...] = pred_ref[...]


def full_predict_rows(user_ids, pred_mat):
    n_users, n_items = pred_mat.shape
    batch = user_ids.shape[0]
    # Clamp ids so a bad id can never become an out-of-bounds row DMA.
    uid = jnp.clip(user_ids.astype(jnp.int32), 0, n_users - 1)
    pred3 = pred_mat.reshape(n_users, 1, n_items)   # keep (1, n_items) full-dim tiles
    out = pl.pallas_call(
        _gather_rows_kernel,
        out_shape=jax.ShapeDtypeStruct((batch, 1, n_items), pred_mat.dtype),
        grid_spec=pltpu.PrefetchScalarGridSpec(
            num_scalar_prefetch=1,
            grid=(batch,),
            in_specs=[pl.BlockSpec((1, 1, n_items),
                                   lambda b, uid: (uid[b], 0, 0))],
            out_specs=pl.BlockSpec((1, 1, n_items),
                                   lambda b, uid: (b, 0, 0))),
        compiler_params=pltpu.CompilerParams(
            dimension_semantics=("parallel",),
            vmem_limit_bytes=_VMEM_LIMIT),
    )(uid, pred3)
    return out.reshape(batch, n_items)


# ---------------------------------------------------------------------------
# ItemKNN "model": precompute (mirrors __init__), forward, full_predict
# ---------------------------------------------------------------------------
class ItemKNNPallas:
    def __init__(self, interaction_matrix, *, top_k=TOP_K):
        # matches nn.Parameter(torch.zeros(1))
        self.fake_loss = jnp.zeros((1,), dtype=jnp.float32)
        self.full_interaction_matrix = interaction_matrix
        # no core-user split in this synthetic setup -> train == full
        self.train_interaction_matrix = interaction_matrix

        # w = sim.cosine(R.T, k=top_k): item-item cosine sim, exact top-k per row.
        s = cosine_similarity(self.train_interaction_matrix)
        self.item_sim = s
        # TODO(synk): sparse CSR top-k as in `sim.cosine(..., k=100)` has no
        # clean Pallas equivalent; exact dense top-k mask in plain JAX instead.
        _, idx = lax.top_k(s, top_k)
        rows = jnp.arange(s.shape[0])[:, None]
        mask = jnp.zeros_like(s).at[rows, idx].set(1.0)
        self.w = s * mask                      # exactly top_k neighbors kept per row

        # pred_mat = full_interaction_matrix.dot(w.T); W^T materialized once so
        # the kernel runs a canonical (m,k)x(k,n) contraction.
        self.pred_mat = matmul_f32acc(self.full_interaction_matrix, self.w.T)

    def __call__(self, batch):
        # forward(batch) returns the zero fake_loss parameter, like the PyTorch
        # module; no kernel — a (1,)-element copy kernel is pure launch overhead.
        del batch
        return self.fake_loss

    def full_predict(self, user_ids):
        return full_predict_rows(user_ids, self.pred_mat)

    def build_user_embeddings(self):
        pass


if __name__ == "__main__":
    key = jax.random.PRNGKey(0)
    # deterministic binary interaction matrix (users x items)
    interactions = (jax.random.uniform(key, (N_USERS, N_ITEMS)) < 0.2).astype(jnp.float32)

    model = ItemKNNPallas(interactions)
    jax.block_until_ready(model.pred_mat)

    # forward pass: returns the zero fake_loss parameter, shape (1,)
    batch = {"userId": jnp.array([3, 7], dtype=jnp.int32)}
    loss = jax.block_until_ready(model(batch))
    assert loss.shape == (1,) and loss.dtype == jnp.float32 and float(loss[0]) == 0.0

    # full_predict: scores for the batch users over all items
    scores = jax.block_until_ready(model.full_predict(batch["userId"]))
    assert scores.shape == (BATCH, N_ITEMS)

    # gather must match direct indexing of pred_mat exactly
    assert jnp.allclose(scores, model.pred_mat[batch["userId"], :], atol=1e-6)

    # reference checks (plain-JAX f32) — bf16 MXU operands => loose tolerance
    r = interactions
    inv_ref = lax.rsqrt(jnp.sum(r * r, axis=0) + 1e-8)
    s_ref = (r.T @ r) * inv_ref[:, None] * inv_ref[None, :]
    s_ref = s_ref * (1.0 - jnp.eye(N_ITEMS, dtype=jnp.float32))
    assert jnp.allclose(model.item_sim, s_ref, atol=1e-2)

    pred_ref = r @ model.w.T
    assert jnp.allclose(model.pred_mat, pred_ref, atol=5e-2)

    print("KERNEL_OK")
</pallas_src>

<mosaic_0001>
module attributes {stable_mosaic.version = 11 : i64} {
  func.func @_cosine_sim_kernel(%arg0: i32, %arg1: i32, %arg2: memref<1xi32, #tpu.memory_space<smem>>, %arg3: memref<1xi32, #tpu.memory_space<smem>>, %arg4: memref<128x128xbf16, #tpu.memory_space<vmem>>, %arg5: memref<128x128xbf16, #tpu.memory_space<vmem>>, %arg6: memref<128x1xf32, #tpu.memory_space<vmem>>, %arg7: memref<1x128xf32, #tpu.memory_space<vmem>>, %arg8: memref<128x128xf32, #tpu.memory_space<vmem>>) attributes {dimension_semantics = [#tpu.dimension_semantics<parallel>, #tpu.dimension_semantics<arbitrary>], iteration_bounds = array<i64: 1, 1>, scalar_prefetch = 2 : i64, scratch_operands = 0 : i64, tpu.core_type = #tpu.core_type<tc>, window_params = [{transform_indices = @transform_0, window_bounds = array<i64: 128, 128>}, {transform_indices = @transform_1, window_bounds = array<i64: 128, 128>}, {transform_indices = @transform_2, window_bounds = array<i64: 128, 1>}, {transform_indices = @transform_3, window_bounds = array<i64: 1, 128>}, {transform_indices = @transform_4, window_bounds = array<i64: 128, 128>}]} {
    %c0_i32 = arith.constant 0 : i32
    %0 = arith.cmpi eq, %arg1, %c0_i32 : i32
    %1 = arith.extui %0 : i1 to i32
    %c0_i32_0 = arith.constant 0 : i32
    %2 = arith.cmpi ne, %1, %c0_i32_0 : i32
    scf.if %2 {
      %cst_10 = arith.constant 0.000000e+00 : f32
      %12 = vector.broadcast %cst_10 : f32 to vector<128x128xf32>
      %c0_11 = arith.constant 0 : index
      %c0_12 = arith.constant 0 : index
      %13 = vector.load %arg8[%c0_11, %c0_12] : memref<128x128xf32, #tpu.memory_space<vmem>>, vector<128x128xf32>
      tpu.vector_store %arg8[%c0_11, %c0_12], %12 {strides = array<i32>} : memref<128x128xf32, #tpu.memory_space<vmem>>, vector<128x128xf32>,
    } else {
    }
    %c0 = arith.constant 0 : index
    %c0_1 = arith.constant 0 : index
    %3 = vector.load %arg8[%c0, %c0_1] : memref<128x128xf32, #tpu.memory_space<vmem>>, vector<128x128xf32>
    %c0_2 = arith.constant 0 : index
    %c0_3 = arith.constant 0 : index
    %4 = vector.load %arg4[%c0_2, %c0_3] : memref<128x128xbf16, #tpu.memory_space<vmem>>, vector<128x128xbf16>
    %c0_4 = arith.constant 0 : index
    %c0_5 = arith.constant 0 : index
    %5 = vector.load %arg5[%c0_4, %c0_5] : memref<128x128xbf16, #tpu.memory_space<vmem>>, vector<128x128xbf16>
    %cst = arith.constant dense<0.000000e+00> : vector<128x128xf32>
    %6 = tpu.matmul %4, %5, %cst {dimension_numbers = #tpu.dot_dimension_numbers<[1], [0], [0], [1], [0, 0, 1, 1], [], []>} : vector<128x128xbf16>, vector<128x128xbf16>, vector<128x128xf32> -> vector<128x128xf32>
    %7 = arith.addf %3, %6 : vector<128x128xf32>
    %c0_6 = arith.constant 0 : index
    %c0_7 = arith.constant 0 : index
    %8 = vector.load %arg8[%c0_6, %c0_7] : memref<128x128xf32, #tpu.memory_space<vmem>>, vector<128x128xf32>
    tpu.vector_store %arg8[%c0_6, %c0_7], %7 {strides = array<i32>} : memref<128x128xf32, #tpu.memory_space<vmem>>, vector<128x128xf32>,
    %c0_i32_8 = arith.constant 0 : i32
    %9 = arith.cmpi eq, %arg1, %c0_i32_8 : i32
    %10 = arith.extui %9 : i1 to i32
    %c0_i32_9 = arith.constant 0 : i32
    %11 = arith.cmpi ne, %10, %c0_i32_9 : i32
    scf.if %11 {
      %c0_10 = arith.constant 0 : index
      %c0_11 = arith.constant 0 : index
      %12 = vector.load %arg8[%c0_10, %c0_11] : memref<128x128xf32, #tpu.memory_space<vmem>>, vector<128x128xf32>
      %c0_12 = arith.constant 0 : index
      %c0_13 = arith.constant 0 : index
      %13 = vector.load %arg6[%c0_12, %c0_13] : memref<128x1xf32, #tpu.memory_space<vmem>>, vector<128x1xf32>
      %14 = vector.broadcast %13 : vector<128x1xf32> to vector<128x128xf32>
      %15 = arith.mulf %12, %14 : vector<128x128xf32>
      %c0_14 = arith.constant 0 : index
      %c0_15 = arith.constant 0 : index
      %16 = vector.load %arg7[%c0_14, %c0_15] : memref<1x128xf32, #tpu.memory_space<vmem>>, vector<1x128xf32>
      %17 = vector.broadcast %16 : vector<1x128xf32> to vector<128x128xf32>
      %18 = arith.mulf %15, %17 : vector<128x128xf32>
      %c0_16 = arith.constant 0 : index
      %c0_17 = arith.constant 0 : index
      %19 = vector.load %arg8[%c0_16, %c0_17] : memref<128x128xf32, #tpu.memory_space<vmem>>, vector<128x128xf32>
      tpu.vector_store %arg8[%c0_16, %c0_17], %18 {strides = array<i32>} : memref<128x128xf32, #tpu.memory_space<vmem>>, vector<128x128xf32>,
    } else {
    }
    return
  }
  func.func @transform_0(%arg0: i32, %arg1: i32, %arg2: memref<1xi32, #tpu.memory_space<smem>>, %arg3: memref<1xi32, #tpu.memory_space<smem>>) -> (i32, i32) {
    %0 = arith.index_cast %arg0 : i32 to index
    %1 = memref.load %arg2[%0] : memref<1xi32, #tpu.memory_space<smem>>
    %c0_i32 = arith.constant 0 : i32
    return %1, %arg1 : i32, i32
  }
  func.func @transform_1(%arg0: i32, %arg1: i32, %arg2: memref<1xi32, #tpu.memory_space<smem>>, %arg3: memref<1xi32, #tpu.memory_space<smem>>) -> (i32, i32) {
    %0 = arith.index_cast %arg0 : i32 to index
    %1 = memref.load %arg3[%0] : memref<1xi32, #tpu.memory_space<smem>>
    %c0_i32 = arith.constant 0 : i32
    return %arg1, %1 : i32, i32
  }
  func.func @transform_2(%arg0: i32, %arg1: i32, %arg2: memref<1xi32, #tpu.memory_space<smem>>, %arg3: memref<1xi32, #tpu.memory_space<smem>>) -> (i32, i32) {
    %0 = arith.index_cast %arg0 : i32 to index
    %1 = memref.load %arg2[%0] : memref<1xi32, #tpu.memory_space<smem>>
    %c0_i32 = arith.constant 0 : i32
    %c0_i32_0 = arith.constant 0 : i32
    return %1, %c0_i32 : i32, i32
  }
  func.func @transform_3(%arg0: i32, %arg1: i32, %arg2: memref<1xi32, #tpu.memory_space<smem>>, %arg3: memref<1xi32, #tpu.memory_space<smem>>) -> (i32, i32) {
    %0 = arith.index_cast %arg0 : i32 to index
    %1 = memref.load %arg3[%0] : memref<1xi32, #tpu.memory_space<smem>>
    %c0_i32 = arith.constant 0 : i32
    %c0_i32_0 = arith.constant 0 : i32
    return %c0_i32, %1 : i32, i32
  }
  func.func @transform_4(%arg0: i32, %arg1: i32, %arg2: memref<1xi32, #tpu.memory_space<smem>>, %arg3: memref<1xi32, #tpu.memory_space<smem>>) -> (i32, i32) {
    %0 = arith.index_cast %arg0 : i32 to index
    %1 = memref.load %arg2[%0] : memref<1xi32, #tpu.memory_space<smem>>
    %2 = arith.index_cast %arg0 : i32 to index
    %3 = memref.load %arg3[%2] : memref<1xi32, #tpu.memory_space<smem>>
    %c0_i32 = arith.constant 0 : i32
    return %1, %3 : i32, i32
  }
}

</mosaic_0001>

<llo_original>
// kernel: tpu_custom_call.1
$region0: #{tpu_custom_call.1}
  #allocation0 [shape = 'u32[]', space=smem, size = 0x4, offset = 0x4, fixed_abs, tag = 'smem constant byte address 0x4 - core index']
  #allocation1 [shape = 'u32[72,128]{1,0:T(1,128)}', space=vmem, size = 0x9000, scoped, tag = 'internal scratch']
  #allocation2 [shape = 's32[1]{0}', space=sflag, size = 0x4, scoped, tag = 'scoped memory for tpu_custom_call.1']
  #allocation3 [shape = 's32[1]{0:T(128)S(6)}', space=smem, size = 0x200, scoped, tag = 'prefetched SMEM operand 0']
  #allocation4 [shape = 's32[1]{0:T(128)S(6)}', space=smem, size = 0x200, scoped, tag = 'prefetched SMEM operand 1']
  %s0 = inlined_call_operand.<no memory space> [shape: s32[1], index: 0, kind: input, shape index: {}]
  %s1 = inlined_call_operand.<no memory space> [shape: s32[1], index: 1, kind: input, shape index: {}]
  %s2 = inlined_call_operand.vmem [shape: bf16[128,128], index: 2, kind: input, shape index: {}]
  %s3 = inlined_call_operand.vmem [shape: bf16[128,128], index: 3, kind: input, shape index: {}]
  %s4 = inlined_call_operand.vmem [shape: f32[128,1], index: 4, kind: input, shape index: {}]
  %s5 = inlined_call_operand.vmem [shape: f32[1,128], index: 5, kind: input, shape index: {}]
  %s6 = inlined_call_operand.hbm [shape: f32[128,128], index: 6, kind: output, shape index: {}]
  %s7 = sld [smem:[#allocation0]]
  $region34: #{tpu_custom_call.1} parent=0
    _
  %s9 = ssub.s32 1, %s7
  %s10 = scalar_select 0, %s9, %s7
  %11 = sst [smem:[#allocation3]] %s0
  %12 = sst [smem:[#allocation4]] %s1
  $region1: #{tpu_custom_call.1} parent=0
    #allocation5 [shape = 'u8[65536]{0}', space=vmem, size = 0x10000, scoped, tag = 'output window, operand 0, single buffered']
    #allocation6 [shape = 's32[1]{0}', space=sflag, size = 0x4, scoped, tag = 'scoped memory for tpu_custom_call.1']
    %13 = vsyncpa [#allocation6], 0
    // Predicated region
    $region2: #{tpu_custom_call.1} parent=1 // pred_check
      _
    $region3: #{tpu_custom_call.1} parent=1 // pred_check_branch
      %15 = sbr.rel (0) target = $region5
    $region4: #{tpu_custom_call.1} parent=1 // pred_region
      %s16 = sld [smem:[#allocation3]]
      %s17 = smul.u32 16, %s16
      %p18 = scmp.lt.s32.totalorder %s17, 15
      %s19 = scalar_select %p18, %s17, 15
      %s20 = smul.addr %s19, 4
      %s21 = scalar_lea.vmem %s2, %s20
      %s22 = sld [smem:[#allocation3]]
      %s23 = smul.u32 16, %s22
    $region5: #{tpu_custom_call.1} parent=1 // pred_fallthru
      _
    // Predicated region
    $region6: #{tpu_custom_call.1} parent=1 // pred_check
      _
    $region7: #{tpu_custom_call.1} parent=1 // pred_check_branch
      %25 = sbr.rel (0) target = $region9
    $region8: #{tpu_custom_call.1} parent=1 // pred_region
      %s26 = sld [smem:[#allocation4]]
      %p27 = scmp.lt.s32.totalorder %s26, 0
      %s28 = scalar_select %p27, %s26, 0
      %s29 = smul.addr %s28, 4
      %s30 = scalar_lea.vmem %s3, %s29
      %s31 = sld [smem:[#allocation4]]
    $region9: #{tpu_custom_call.1} parent=1 // pred_fallthru
      _
    // Predicated region
    $region10: #{tpu_custom_call.1} parent=1 // pred_check
      _
    $region11: #{tpu_custom_call.1} parent=1 // pred_check_branch
      %33 = sbr.rel (0) target = $region13
    $region12: #{tpu_custom_call.1} parent=1 // pred_region
      %s34 = sld [smem:[#allocation3]]
      %s35 = smul.u32 16, %s34
      %p36 = scmp.lt.s32.totalorder %s35, 15
      %s37 = scalar_select %p36, %s35, 15
      %s38 = smul.addr %s37, 8
      %s39 = scalar_lea.vmem %s4, %s38
      %s40 = sld [smem:[#allocation3]]
      %s41 = smul.u32 16, %s40
    $region13: #{tpu_custom_call.1} parent=1 // pred_fallthru
      _
    // Predicated region
    $region14: #{tpu_custom_call.1} parent=1 // pred_check
      _
    $region15: #{tpu_custom_call.1} parent=1 // pred_check_branch
      %43 = sbr.rel (0) target = $region17
    $region16: #{tpu_custom_call.1} parent=1 // pred_region
      %s44 = sld [smem:[#allocation4]]
      %p45 = scmp.lt.s32.totalorder %s44, 0
      %s46 = scalar_select %p45, %s44, 0
      %s47 = scalar_lea.vmem %s5, %s46
      %s48 = sld [smem:[#allocation4]]
    $region17: #{tpu_custom_call.1} parent=1 // pred_fallthru
      _
    %s49 = sld [smem:[#allocation3]]
    %s50 = smul.u32 16, %s49
    %p51 = scmp.lt.s32.totalorder %s50, 15
    %s52 = scalar_select %p51, %s50, 15
    %s53 = smul.addr %s52, 4
    %s54 = scalar_lea.vmem %s2, %s53
    %s55 = sld [smem:[#allocation4]]
    %p56 = scmp.lt.s32.totalorder %s55, 0
    %s57 = scalar_select %p56, %s55, 0
    %s58 = smul.addr %s57, 4
    %s59 = scalar_lea.vmem %s3, %s58
    %s60 = sld [smem:[#allocation3]]
    %s61 = smul.u32 16, %s60
    %p62 = scmp.lt.s32.totalorder %s61, 15
    %s63 = scalar_select %p62, %s61, 15
    %s64 = smul.addr %s63, 8
    %s65 = scalar_lea.vmem %s4, %s64
    %s66 = sld [smem:[#allocation4]]
    %p67 = scmp.lt.s32.totalorder %s66, 0
    %s68 = scalar_select %p67, %s66, 0
    %s69 = scalar_lea.vmem %s5, %s68
    %s70 = sld [smem:[#allocation3]]
    %s71 = smul.u32 16, %s70
    %p72 = scmp.lt.s32.totalorder %s71, 15
    %s73 = scalar_select %p72, %s71, 15
    %s74 = smul.addr %s73, 4
    %s75 = scalar_lea.vmem %s2, %s74
    %s76 = sld [smem:[#allocation3]]
    %s77 = smul.u32 16, %s76
    %s78 = sld [smem:[#allocation4]]
    %p79 = scmp.lt.s32.totalorder %s78, 0
    %s80 = scalar_select %p79, %s78, 0
    %s81 = smul.addr %s80, 4
    %s82 = scalar_lea.vmem %s3, %s81
    %s83 = sld [smem:[#allocation4]]
    %s84 = sld [smem:[#allocation3]]
    %s85 = smul.u32 16, %s84
    %p86 = scmp.lt.s32.totalorder %s85, 15
    %s87 = scalar_select %p86, %s85, 15
    %s88 = smul.addr %s87, 8
    %s89 = scalar_lea.vmem %s4, %s88
    %s90 = sld [smem:[#allocation3]]
    %s91 = smul.u32 16, %s90
    %s92 = sld [smem:[#allocation4]]
    %p93 = scmp.lt.s32.totalorder %s92, 0
    %s94 = scalar_select %p93, %s92, 0
    %s95 = scalar_lea.vmem %s5, %s94
    %s96 = sld [smem:[#allocation4]]
    %s97 = sld [smem:[#allocation3]]
    %s98 = sld [smem:[#allocation4]]
    %s99 = smul.u32 16, %s97
    %p100 = scmp.eq.s32.totalorder 0, 0
    // Predicated region
    $region18: #{tpu_custom_call.1} parent=1 // pred_check
      %p101 = pneg %p100
    $region19: #{tpu_custom_call.1} parent=1 // pred_check_branch
      %103 = sbr.rel (%p101) target = $region21
    $region20: #{tpu_custom_call.1} parent=1 // pred_region
      %104 = vst [vmem:[#allocation5] sm:$0xff] 0.0
      %105 = vst [vmem:[#allocation5 + $0x8] sm:$0xff] 0.0
      %106 = vst [vmem:[#allocation5 + $0x10] sm:$0xff] 0.0
      %107 = vst [vmem:[#allocation5 + $0x18] sm:$0xff] 0.0
      %108 = vst [vmem:[#allocation5 + $0x20] sm:$0xff] 0.0
      %109 = vst [vmem:[#allocation5 + $0x28] sm:$0xff] 0.0
      %110 = vst [vmem:[#allocation5 + $0x30] sm:$0xff] 0.0
      %111 = vst [vmem:[#allocation5 + $0x38] sm:$0xff] 0.0
      %112 = vst [vmem:[#allocation5 + $0x40] sm:$0xff] 0.0
      %113 = vst [vmem:[#allocation5 + $0x48] sm:$0xff] 0.0
      %114 = vst [vmem:[#allocation5 + $0x50] sm:$0xff] 0.0
      %115 = vst [vmem:[#allocation5 + $0x58] sm:$0xff] 0.0
      %116 = vst [vmem:[#allocation5 + $0x60] sm:$0xff] 0.0
      %117 = vst [vmem:[#allocation5 + $0x68] sm:$0xff] 0.0
      %118 = vst [vmem:[#allocation5 + $0x70] sm:$0xff] 0.0
      %119 = vst [vmem:[#allocation5 + $0x78] sm:$0xff] 0.0
    $region21: #{tpu_custom_call.1} parent=1 // pred_fallthru
      _
    %v120 = vld [vmem:[#allocation5] sm:$0xff]
    %v121 = vld [vmem:[#allocation5 + $0x8] sm:$0xff]
    %v122 = vld [vmem:[#allocation5 + $0x10] sm:$0xff]
    %v123 = vld [vmem:[#allocation5 + $0x18] sm:$0xff]
    %v124 = vld [vmem:[#allocation5 + $0x20] sm:$0xff]
    %v125 = vld [vmem:[#allocation5 + $0x28] sm:$0xff]
    %v126 = vld [vmem:[#allocation5 + $0x30] sm:$0xff]
    %v127 = vld [vmem:[#allocation5 + $0x38] sm:$0xff]
    %v128 = vld [vmem:[#allocation5 + $0x40] sm:$0xff]
    %v129 = vld [vmem:[#allocation5 + $0x48] sm:$0xff]
    %v130 = vld [vmem:[#allocation5 + $0x50] sm:$0xff]
    %v131 = vld [vmem:[#allocation5 + $0x58] sm:$0xff]
    %v132 = vld [vmem:[#allocation5 + $0x60] sm:$0xff]
    %v133 = vld [vmem:[#allocation5 + $0x68] sm:$0xff]
    %v134 = vld [vmem:[#allocation5 + $0x70] sm:$0xff]
    %v135 = vld [vmem:[#allocation5 + $0x78] sm:$0xff]
    %v136 = vld [vmem:[%s75] sm:$0xf]
    %v137 = vld [vmem:[%s75 + $0x4] sm:$0xf]
    %v138 = vld [vmem:[%s75 + $0x8] sm:$0xf]
    %v139 = vld [vmem:[%s75 + $0xc] sm:$0xf]
    %v140 = vld [vmem:[%s75 + $0x10] sm:$0xf]
    %v141 = vld [vmem:[%s75 + $0x14] sm:$0xf]
    %v142 = vld [vmem:[%s75 + $0x18] sm:$0xf]
    %v143 = vld [vmem:[%s75 + $0x1c] sm:$0xf]
    %v144 = vld [vmem:[%s75 + $0x20] sm:$0xf]
    %v145 = vld [vmem:[%s75 + $0x24] sm:$0xf]
    %v146 = vld [vmem:[%s75 + $0x28] sm:$0xf]
    %v147 = vld [vmem:[%s75 + $0x2c] sm:$0xf]
    %v148 = vld [vmem:[%s75 + $0x30] sm:$0xf]
    %v149 = vld [vmem:[%s75 + $0x34] sm:$0xf]
    %v150 = vld [vmem:[%s75 + $0x38] sm:$0xf]
    %v151 = vld [vmem:[%s75 + $0x3c] sm:$0xf]
    %v152 = vld [vmem:[%s82] sm:$0xf]
    %v153 = vld [vmem:[%s82 + $0x4] sm:$0xf]
    %v154 = vld [vmem:[%s82 + $0x8] sm:$0xf]
    %v155 = vld [vmem:[%s82 + $0xc] sm:$0xf]
    %v156 = vld [vmem:[%s82 + $0x10] sm:$0xf]
    %v157 = vld [vmem:[%s82 + $0x14] sm:$0xf]
    %v158 = vld [vmem:[%s82 + $0x18] sm:$0xf]
    %v159 = vld [vmem:[%s82 + $0x1c] sm:$0xf]
    %v160 = vld [vmem:[%s82 + $0x20] sm:$0xf]
    %v161 = vld [vmem:[%s82 + $0x24] sm:$0xf]
    %v162 = vld [vmem:[%s82 + $0x28] sm:$0xf]
    %v163 = vld [vmem:[%s82 + $0x2c] sm:$0xf]
    %v164 = vld [vmem:[%s82 + $0x30] sm:$0xf]
    %v165 = vld [vmem:[%s82 + $0x34] sm:$0xf]
    %v166 = vld [vmem:[%s82 + $0x38] sm:$0xf]
    %v167 = vld [vmem:[%s82 + $0x3c] sm:$0xf]
    %v184 = vunpack.c.l.b16 %v136
    %v185 = vunpack.c.l.b16 %v137
    %v186 = vunpack.c.l.b16 %v138
    %v187 = vunpack.c.l.b16 %v139
    %v188 = vunpack.c.l.b16 %v140
    %v189 = vunpack.c.l.b16 %v141
    %v190 = vunpack.c.l.b16 %v142
    %v191 = vunpack.c.l.b16 %v143
    %v192 = vunpack.c.l.b16 %v144
    %v193 = vunpack.c.l.b16 %v145
    %v194 = vunpack.c.l.b16 %v146
    %v195 = vunpack.c.l.b16 %v147
    %v196 = vunpack.c.l.b16 %v148
    %v197 = vunpack.c.l.b16 %v149
    %v198 = vunpack.c.l.b16 %v150
    %v199 = vunpack.c.l.b16 %v151
    %v200 = vpack.c.b16 %v185, %v184
    %v201 = vpack.c.b16 %v187, %v186
    %v202 = vpack.c.b16 %v189, %v188
    %v203 = vpack.c.b16 %v191, %v190
    %v204 = vpack.c.b16 %v193, %v192
    %v205 = vpack.c.b16 %v195, %v194
    %v206 = vpack.c.b16 %v197, %v196
    %v207 = vpack.c.b16 %v199, %v198
    %v232 = vunpack.c.l.b16 %v152
    %v233 = vunpack.c.l.b16 %v153
    %v234 = vunpack.c.l.b16 %v154
    %v235 = vunpack.c.l.b16 %v155
    %v236 = vunpack.c.l.b16 %v156
    %v237 = vunpack.c.l.b16 %v157
    %v238 = vunpack.c.l.b16 %v158
    %v239 = vunpack.c.l.b16 %v159
    %v240 = vunpack.c.l.b16 %v160
    %v241 = vunpack.c.l.b16 %v161
    %v242 = vunpack.c.l.b16 %v162
    %v243 = vunpack.c.l.b16 %v163
    %v244 = vunpack.c.l.b16 %v164
    %v245 = vunpack.c.l.b16 %v165
    %v246 = vunpack.c.l.b16 %v166
    %v247 = vunpack.c.l.b16 %v167
    %v248 = vpack.c.b16 %v233, %v232
    %v249 = vpack.c.b16 %v235, %v234
    %v250 = vpack.c.b16 %v237, %v236
    %v251 = vpack.c.b16 %v239, %v238
    %v252 = vpack.c.b16 %v241, %v240
    %v253 = vpack.c.b16 %v243, %v242
    %v254 = vpack.c.b16 %v245, %v244
    %v255 = vpack.c.b16 %v247, %v246
    %264 = vmatpush.bf16.msra.mxu0 %v255
    %265 = vmatpush.bf16.msra.mxu0 %v254
    %266 = vmatpush.bf16.msra.mxu0 %v253
    %267 = vmatpush.bf16.msra.mxu0 %v252
    %268 = vmatpush.bf16.msra.mxu0 %v251
    %269 = vmatpush.bf16.msra.mxu0 %v250
    %270 = vmatpush.bf16.msra.mxu0 %v249
    %271 = vmatpush.bf16.msra.mxu0 %v248
    %272 = vmatmul.bf16.gmra.mxu0 %v200
    %v273 = vpop.f32.mrf.mxu0
    %v274 = vadd.f32 0.0, %v273
    %v275 = vpop.f32.mrf.mxu0
    %v276 = vadd.f32 0.0, %v275
    %277 = vmatmul.bf16.gmra.mxu0 %v201
    %v278 = vpop.f32.mrf.mxu0
    %v279 = vadd.f32 0.0, %v278
    %v280 = vpop.f32.mrf.mxu0
    %v281 = vadd.f32 0.0, %v280
    %282 = vmatmul.bf16.gmra.mxu0 %v202
    %v283 = vpop.f32.mrf.mxu0
    %v284 = vadd.f32 0.0, %v283
    %v285 = vpop.f32.mrf.mxu0
    %v286 = vadd.f32 0.0, %v285
    %287 = vmatmul.bf16.gmra.mxu0 %v203
    %v288 = vpop.f32.mrf.mxu0
    %v289 = vadd.f32 0.0, %v288
    %v290 = vpop.f32.mrf.mxu0
    %v291 = vadd.f32 0.0, %v290
    %292 = vmatmul.bf16.gmra.mxu0 %v204
    %v293 = vpop.f32.mrf.mxu0
    %v294 = vadd.f32 0.0, %v293
    %v295 = vpop.f32.mrf.mxu0
    %v296 = vadd.f32 0.0, %v295
    %297 = vmatmul.bf16.gmra.mxu0 %v205
    %v298 = vpop.f32.mrf.mxu0
    %v299 = vadd.f32 0.0, %v298
    %v300 = vpop.f32.mrf.mxu0
    %v301 = vadd.f32 0.0, %v300
    %302 = vmatmul.bf16.gmra.mxu0 %v206
    %v303 = vpop.f32.mrf.mxu0
    %v304 = vadd.f32 0.0, %v303
    %v305 = vpop.f32.mrf.mxu0
    %v306 = vadd.f32 0.0, %v305
    %307 = vmatmul.bf16.gmra.mxu0 %v207
    %v308 = vpop.f32.mrf.mxu0
    %v309 = vadd.f32 0.0, %v308
    %v310 = vpop.f32.mrf.mxu0
    %v311 = vadd.f32 0.0, %v310
    %312 = vdwg.mxu0
    %v313 = vadd.f32 %v120, %v274
    %v314 = vadd.f32 %v121, %v276
    %v315 = vadd.f32 %v122, %v279
    %v316 = vadd.f32 %v123, %v281
    %v317 = vadd.f32 %v124, %v284
    %v318 = vadd.f32 %v125, %v286
    %v319 = vadd.f32 %v126, %v289
    %v320 = vadd.f32 %v127, %v291
    %v321 = vadd.f32 %v128, %v294
    %v322 = vadd.f32 %v129, %v296
    %v323 = vadd.f32 %v130, %v299
    %v324 = vadd.f32 %v131, %v301
    %v325 = vadd.f32 %v132, %v304
    %v326 = vadd.f32 %v133, %v306
    %v327 = vadd.f32 %v134, %v309
    %v328 = vadd.f32 %v135, %v311
    %329 = vst [vmem:[#allocation5] sm:$0xff] %v313
    %330 = vst [vmem:[#allocation5 + $0x8] sm:$0xff] %v314
    %331 = vst [vmem:[#allocation5 + $0x10] sm:$0xff] %v315
    %332 = vst [vmem:[#allocation5 + $0x18] sm:$0xff] %v316
    %333 = vst [vmem:[#allocation5 + $0x20] sm:$0xff] %v317
    %334 = vst [vmem:[#allocation5 + $0x28] sm:$0xff] %v318
    %335 = vst [vmem:[#allocation5 + $0x30] sm:$0xff] %v319
    %336 = vst [vmem:[#allocation5 + $0x38] sm:$0xff] %v320
    %337 = vst [vmem:[#allocation5 + $0x40] sm:$0xff] %v321
    %338 = vst [vmem:[#allocation5 + $0x48] sm:$0xff] %v322
    %339 = vst [vmem:[#allocation5 + $0x50] sm:$0xff] %v323
    %340 = vst [vmem:[#allocation5 + $0x58] sm:$0xff] %v324
    %341 = vst [vmem:[#allocation5 + $0x60] sm:$0xff] %v325
    %342 = vst [vmem:[#allocation5 + $0x68] sm:$0xff] %v326
    %343 = vst [vmem:[#allocation5 + $0x70] sm:$0xff] %v327
    %344 = vst [vmem:[#allocation5 + $0x78] sm:$0xff] %v328
    // Predicated region
    $region22: #{tpu_custom_call.1} parent=1 // pred_check
      %p345 = pneg %p100
    $region23: #{tpu_custom_call.1} parent=1 // pred_check_branch
      %347 = sbr.rel (%p345) target = $region25
    $region24: #{tpu_custom_call.1} parent=1 // pred_region
      %v348 = vld [vmem:[#allocation5] sm:$0xff]
      %v349 = vld [vmem:[#allocation5 + $0x8] sm:$0xff]
      %v350 = vld [vmem:[#allocation5 + $0x10] sm:$0xff]
      %v351 = vld [vmem:[#allocation5 + $0x18] sm:$0xff]
      %v352 = vld [vmem:[#allocation5 + $0x20] sm:$0xff]
      %v353 = vld [vmem:[#allocation5 + $0x28] sm:$0xff]
      %v354 = vld [vmem:[#allocation5 + $0x30] sm:$0xff]
      %v355 = vld [vmem:[#allocation5 + $0x38] sm:$0xff]
      %v356 = vld [vmem:[#allocation5 + $0x40] sm:$0xff]
      %v357 = vld [vmem:[#allocation5 + $0x48] sm:$0xff]
      %v358 = vld [vmem:[#allocation5 + $0x50] sm:$0xff]
      %v359 = vld [vmem:[#allocation5 + $0x58] sm:$0xff]
      %v360 = vld [vmem:[#allocation5 + $0x60] sm:$0xff]
      %v361 = vld [vmem:[#allocation5 + $0x68] sm:$0xff]
      %v362 = vld [vmem:[#allocation5 + $0x70] sm:$0xff]
      %v363 = vld [vmem:[#allocation5 + $0x78] sm:$0xff]
      %v364 = vld [vmem:[%s89] sm:$0xff]
      %v365 = vld [vmem:[%s89 + $0x8] sm:$0xff]
      %v366 = vld [vmem:[%s89 + $0x10] sm:$0xff]
      %v367 = vld [vmem:[%s89 + $0x18] sm:$0xff]
      %v368 = vld [vmem:[%s89 + $0x20] sm:$0xff]
      %v369 = vld [vmem:[%s89 + $0x28] sm:$0xff]
      %v370 = vld [vmem:[%s89 + $0x30] sm:$0xff]
      %v371 = vld [vmem:[%s89 + $0x38] sm:$0xff]
      %v372 = vld [vmem:[%s89 + $0x40] sm:$0xff]
      %v373 = vld [vmem:[%s89 + $0x48] sm:$0xff]
      %v374 = vld [vmem:[%s89 + $0x50] sm:$0xff]
      %v375 = vld [vmem:[%s89 + $0x58] sm:$0xff]
      %v376 = vld [vmem:[%s89 + $0x60] sm:$0xff]
      %v377 = vld [vmem:[%s89 + $0x68] sm:$0xff]
      %v378 = vld [vmem:[%s89 + $0x70] sm:$0xff]
      %v379 = vld [vmem:[%s89 + $0x78] sm:$0xff]
      %381 = vset.pattern.permute.xlu0 0
      %382 = vperm.xlu0 %381, %v364
      %v383 = vpop.permute.xlu0 %382
      %386 = vset.pattern.permute.xlu0 0
      %387 = vperm.xlu0 %386, %v365
      %v388 = vpop.permute.xlu0 %387
      %391 = vset.pattern.permute.xlu0 0
      %392 = vperm.xlu0 %391, %v366
      %v393 = vpop.permute.xlu0 %392
      %396 = vset.pattern.permute.xlu0 0
      %397 = vperm.xlu0 %396, %v367
      %v398 = vpop.permute.xlu0 %397
      %401 = vset.pattern.permute.xlu0 0
      %402 = vperm.xlu0 %401, %v368
      %v403 = vpop.permute.xlu0 %402
      %406 = vset.pattern.permute.xlu0 0
      %407 = vperm.xlu0 %406, %v369
      %v408 = vpop.permute.xlu0 %407
      %411 = vset.pattern.permute.xlu0 0
      %412 = vperm.xlu0 %411, %v370
      %v413 = vpop.permute.xlu0 %412
      %416 = vset.pattern.permute.xlu0 0
      %417 = vperm.xlu0 %416, %v371
      %v418 = vpop.permute.xlu0 %417
      %421 = vset.pattern.permute.xlu0 0
      %422 = vperm.xlu0 %421, %v372
      %v423 = vpop.permute.xlu0 %422
      %426 = vset.pattern.permute.xlu0 0
      %427 = vperm.xlu0 %426, %v373
      %v428 = vpop.permute.xlu0 %427
      %431 = vset.pattern.permute.xlu0 0
      %432 = vperm.xlu0 %431, %v374
      %v433 = vpop.permute.xlu0 %432
      %436 = vset.pattern.permute.xlu0 0
      %437 = vperm.xlu0 %436, %v375
      %v438 = vpop.permute.xlu0 %437
      %441 = vset.pattern.permute.xlu0 0
      %442 = vperm.xlu0 %441, %v376
      %v443 = vpop.permute.xlu0 %442
      %446 = vset.pattern.permute.xlu0 0
      %447 = vperm.xlu0 %446, %v377
      %v448 = vpop.permute.xlu0 %447
      %451 = vset.pattern.permute.xlu0 0
      %452 = vperm.xlu0 %451, %v378
      %v453 = vpop.permute.xlu0 %452
      %456 = vset.pattern.permute.xlu0 0
      %457 = vperm.xlu0 %456, %v379
      %v458 = vpop.permute.xlu0 %457
      %v460 = vmul.f32 %v348, %v383
      %v461 = vmul.f32 %v349, %v388
      %v462 = vmul.f32 %v350, %v393
      %v463 = vmul.f32 %v351, %v398
      %v464 = vmul.f32 %v352, %v403
      %v465 = vmul.f32 %v353, %v408
      %v466 = vmul.f32 %v354, %v413
      %v467 = vmul.f32 %v355, %v418
      %v468 = vmul.f32 %v356, %v423
      %v469 = vmul.f32 %v357, %v428
      %v470 = vmul.f32 %v358, %v433
      %v471 = vmul.f32 %v359, %v438
      %v472 = vmul.f32 %v360, %v443
      %v473 = vmul.f32 %v361, %v448
      %v474 = vmul.f32 %v362, %v453
      %v475 = vmul.f32 %v363, %v458
      %v476 = vld [vmem:[%s95] sm:$0x1]
      %v478 = vperm.slane %v476, 0
      %v480 = vmul.f32 %v460, %v478
      %v481 = vmul.f32 %v461, %v478
      %v482 = vmul.f32 %v462, %v478
      %v483 = vmul.f32 %v463, %v478
      %v484 = vmul.f32 %v464, %v478
      %v485 = vmul.f32 %v465, %v478
      %v486 = vmul.f32 %v466, %v478
      %v487 = vmul.f32 %v467, %v478
      %v488 = vmul.f32 %v468, %v478
      %v489 = vmul.f32 %v469, %v478
      %v490 = vmul.f32 %v470, %v478
      %v491 = vmul.f32 %v471, %v478
      %v492 = vmul.f32 %v472, %v478
      %v493 = vmul.f32 %v473, %v478
      %v494 = vmul.f32 %v474, %v478
      %v495 = vmul.f32 %v475, %v478
      %496 = vst [vmem:[#allocation5] sm:$0xff] %v480
      %497 = vst [vmem:[#allocation5 + $0x8] sm:$0xff] %v481
      %498 = vst [vmem:[#allocation5 + $0x10] sm:$0xff] %v482
      %499 = vst [vmem:[#allocation5 + $0x18] sm:$0xff] %v483
      %500 = vst [vmem:[#allocation5 + $0x20] sm:$0xff] %v484
      %501 = vst [vmem:[#allocation5 + $0x28] sm:$0xff] %v485
      %502 = vst [vmem:[#allocation5 + $0x30] sm:$0xff] %v486
      %503 = vst [vmem:[#allocation5 + $0x38] sm:$0xff] %v487
      %504 = vst [vmem:[#allocation5 + $0x40] sm:$0xff] %v488
      %505 = vst [vmem:[#allocation5 + $0x48] sm:$0xff] %v489
      %506 = vst [vmem:[#allocation5 + $0x50] sm:$0xff] %v490
      %507 = vst [vmem:[#allocation5 + $0x58] sm:$0xff] %v491
      %508 = vst [vmem:[#allocation5 + $0x60] sm:$0xff] %v492
      %509 = vst [vmem:[#allocation5 + $0x68] sm:$0xff] %v493
      %510 = vst [vmem:[#allocation5 + $0x70] sm:$0xff] %v494
      %511 = vst [vmem:[#allocation5 + $0x78] sm:$0xff] %v495
    $region25: #{tpu_custom_call.1} parent=1 // pred_fallthru
      _
    // Predicated region
    $region26: #{tpu_custom_call.1} parent=1 // pred_check
      _
    $region27: #{tpu_custom_call.1} parent=1 // pred_check_branch
      %513 = sbr.rel (0) target = $region29
    $region28: #{tpu_custom_call.1} parent=1 // pred_region
      %s514 = sld [smem:[#allocation3]]
      %s515 = sld [smem:[#allocation4]]
      %s516 = smul.u32 16, %s514
      %518 = vsyncadd [#allocation6], 0
      %s519 = sadd.s32 %s515, %s516
      %s520 = smul.addr %s519, 8
      %s521 = scalar_lea.hbm %s6, %s520
      %s522 = sshll.u32 [#allocation5], 4
      %s523 = int_to_ptr.vmem [resolvable:$true] %s522
      %s524 = sshll.u32 %s521, 4
      %s525 = int_to_ptr.hbm [resolvable:$true] %s524
      %530 = dma.vmem_to_hbm [thread:$0]  %s523, 2048, %s525, [#allocation6], 128, 128, 8
    $region29: #{tpu_custom_call.1} parent=1 // pred_fallthru
      _
    // Predicated region
    $region30: #{tpu_custom_call.1} parent=1 // pred_check
      _
    $region31: #{tpu_custom_call.1} parent=1 // pred_check_branch
      %532 = sbr.rel (0) target = $region33
    $region32: #{tpu_custom_call.1} parent=1 // pred_region
      %534 = dma.done [#allocation6], 2048
    $region33: #{tpu_custom_call.1} parent=1 // pred_fallthru
      _
    %535 = vsyncpa [#allocation6], 1

</llo_original>
